<compile_context>
chip_gen: v7x
topology: tpu7x:2x2x1
jax: 0.10.0
libtpu: 0.0.40
codegen_flags: <defaults>
</compile_context>

<pallas_src>
import functools

import jax
import jax.numpy as jnp
from jax import lax
from jax.experimental import pallas as pl
from jax.experimental.pallas import tpu as pltpu

_MiB = 1024 * 1024


def _pair(v):
    if isinstance(v, (tuple, list)):
        return (int(v[0]), int(v[1]))
    return (int(v), int(v))


def _round_up(v, m):
    return -(-int(v) // int(m)) * int(m)


def _idx(start, size, stride):
    return pl.ds(start, size) if stride == 1 else pl.ds(start, size, stride)


# --------------------------------------------------------------------------
# Kernel
# --------------------------------------------------------------------------
def _maxpool_kernel(x_ref, o_ref, rowpool_ref, *, channels_last,
                    kernel_size, stride, dilation, pad, in_hw, out_hw):
    """Separable replicate-pad max-pool on one block.

    channels_last=True : refs are (H, W, B) / (Ho, Wo, B) / (Hp, Wo, B); the B
        slab (N*C or C) rides the 128-lane axis, W rides sublanes, H is outer.
    channels_last=False: refs are (B, H, W) / (B, Ho, Wo) / (B, Hp, Wo); W
        rides lanes (only used when W is lane-friendly), H rides sublanes.

    Pass 1 reduces over kw at unit window step straight from x_ref into the
    rowpool scratch; replicate padding in W is folded in by computing the few
    clamped boundary columns separately (no padded-plane copy).  The top /
    bottom replicate rows are written once each, then pass 2 reduces over kh
    with the output stride applied on the read.  The max accumulates in the
    input dtype (no implicit f32 widening).
    """
    kh_sz, kw_sz = kernel_size
    sh, sw = stride
    dh, dw = dilation
    left, right, top, bottom = pad
    h, w = in_hw
    ho, wo = out_hw

    if channels_last:
        def ix(hi, wi):
            return (hi, wi, slice(None))
    else:
        def ix(hi, wi):
            return (slice(None), hi, wi)

    # ---- Pass 1: kw reduction (x -> rowpool rows [top, top + h)) ----------
    # Output columns whose whole kw-window lies inside [0, w) need no clamping.
    j_lo = -(-left // sw)                                   # ceil(left / sw)
    j_hi = (w - 1 + left - (kw_sz - 1) * dw) // sw
    j_lo = min(max(j_lo, 0), wo)
    j_hi = min(j_hi, wo - 1)
    n_int = j_hi - j_lo + 1

    if n_int > 0:
        acc = None
        for kw in range(kw_sz):
            start = kw * dw - left + j_lo * sw              # >= 0 by construction
            win = x_ref[ix(slice(None), _idx(start, n_int, sw))]
            acc = win if acc is None else jnp.maximum(acc, win)
        rowpool_ref[ix(pl.ds(top, h), pl.ds(j_lo, n_int))] = acc

    # Boundary columns (at most ~left + ~right of them): the replicate padding
    # shows up as clamping the source column into [0, w).
    for j in [j for j in range(wo) if j < j_lo or j > j_hi]:
        acc = None
        for kw in range(kw_sz):
            c = min(max(kw * dw - left + j * sw, 0), w - 1)
            win = x_ref[ix(slice(None), pl.ds(c, 1))]
            acc = win if acc is None else jnp.maximum(acc, win)
        rowpool_ref[ix(pl.ds(top, h), pl.ds(j, 1))] = acc

    # ---- Replicate-pad rowpool in H: one write per halo row ---------------
    for r in range(top):
        rowpool_ref[ix(pl.ds(r, 1), slice(None))] = \
            rowpool_ref[ix(pl.ds(top, 1), slice(None))]
    for r in range(bottom):
        rowpool_ref[ix(pl.ds(top + h + r, 1), slice(None))] = \
            rowpool_ref[ix(pl.ds(top + h - 1, 1), slice(None))]

    # ---- Pass 2: kh reduction, output stride applied on the read ----------
    acc = None
    for kh in range(kh_sz):
        win = rowpool_ref[ix(_idx(kh * dh, ho, sh), slice(None))]
        acc = win if acc is None else jnp.maximum(acc, win)
    o_ref[...] = acc


# --------------------------------------------------------------------------
# VMEM budgeting / block sizing
# --------------------------------------------------------------------------
def _vmem_plan():
    """Per-generation VMEM sizing.  v5e/v6e: 128 MiB VMEM, single TensorCore
    (big blocks, no forced grid split).  v7x (or unknown): 64 MiB VMEM, 2 TCs
    (conservative budget, force >= 2 'parallel' blocks so both cores work)."""
    cap = 64 * _MiB
    try:
        info = pltpu.get_tpu_info()
        cap = int(getattr(info, "vmem_capacity_bytes", cap) or cap)
    except Exception:
        pass  # fall back to v7x-safe sizing
    if cap >= 100 * _MiB:
        return {"budget": 48 * _MiB, "limit": 96 * _MiB, "force_split": False}
    return {"budget": 10 * _MiB, "limit": 32 * _MiB, "force_split": True}


def _per_lane_bytes(h, w, hp, ho, wo, itemsize):
    """VMEM bytes per lane unit for the channels-last layout: double-buffered
    input + output blocks (BlockSpec pipeline) plus the single rowpool scratch,
    with the second-minor (sublane) dim rounded to its layout granule."""
    sub = 8 * max(1, 4 // itemsize)
    rs = lambda v: _round_up(max(int(v), 1), sub)
    return itemsize * (2 * h * rs(w) + 2 * ho * rs(wo) + hp * rs(wo))


def _per_nc_bytes(h, w, hp, ho, wo, itemsize):
    """VMEM bytes per (n, c) plane for the NCHW-direct layout (W on lanes)."""
    sub = 8 * max(1, 4 // itemsize)
    rs = lambda v: _round_up(max(int(v), 1), sub)
    rl = lambda v: _round_up(max(int(v), 1), 128)
    return itemsize * (2 * rs(h) * rl(w) + 2 * rs(ho) * rl(wo) + rs(hp) * rl(wo))


def _pick_block(total, per_unit_bytes, budget_bytes, force_split):
    """Block size along the tiled axis (lane axis for channels-last, outer N*C
    axis for NCHW-direct).  Blocks are multiples of 128 (BlockSpec tiling
    constraint / lane density) unless a single block covers the whole axis;
    when splitting, blocks are as balanced as 128-alignment allows."""
    if total <= 128:
        return int(total)
    units = budget_bytes // max(int(per_unit_bytes), 1)
    # TODO(synk): planes so large that even 128 units exceed the budget need
    # spatial (H-halo) tiling as a second grid axis; blocks here span the
    # whole H*W plane and tile only the N*C axis.
    units = max(128, (units // 128) * 128)
    nblk = pl.cdiv(total, units)
    if force_split:
        nblk = max(nblk, 2)     # shard the 'parallel' axis across v7x's 2 TCs
    if nblk == 1:
        return int(total)
    b = _round_up(pl.cdiv(total, nblk), 128)
    return int(min(b, total))


def _out_hw(h, w, ksize, strd, dil, pad):
    left, right, top, bottom = pad
    hp, wp = h + top + bottom, w + left + right
    ho = (hp - dil[0] * (ksize[0] - 1) - 1) // strd[0] + 1
    wo = (wp - dil[1] * (ksize[1] - 1) - 1) // strd[1] + 1
    return hp, wp, ho, wo


# --------------------------------------------------------------------------
# Wrappers
# --------------------------------------------------------------------------
def padded_max_pool2d(x, kernel_size, stride=None, padding=(0, 0, 0, 0), dilation=1):
    """Equivalent of PaddedMaxPool2d.forward for NCHW `x`.

    Lane-friendly inputs (W >= 128, unit W-stride) are pooled directly on the
    NCHW layout (free reshape, zero layout passes).  Small-W inputs use the
    lane-dense (H, W, N*C) layout, which needs one transpose each way; models
    that are channels-last end-to-end should call padded_max_pool2d_nhwc and
    pay no layout cost at all.
    Note: when N*C (or C) is not a multiple of the block, the ragged last
    block feeds Pallas-padded garbage lanes through the max; the masked output
    store discards them, so results stay correct.
    """
    ksize = _pair(kernel_size)
    strd = _pair(stride if stride else kernel_size)
    dil = _pair(dilation)
    left, right, top, bottom = (int(p) for p in padding)
    pad = (left, right, top, bottom)

    n, c, h, w = x.shape
    hp, _, ho, wo = _out_hw(h, w, ksize, strd, dil, pad)
    nc = n * c
    itemsize = jnp.dtype(x.dtype).itemsize
    plan = _vmem_plan()

    common = dict(kernel_size=ksize, stride=strd, dilation=dil, pad=pad,
                  in_hw=(h, w), out_hw=(ho, wo))

    if w >= 128 and strd[1] == 1:
        # ---- NCHW-direct: no layout passes; W rides the 128 lanes. --------
        # TODO(synk): lane-strided subsampling (W-stride > 1) in this path.
        x_r = x.reshape(nc, h, w)                       # free reshape
        per_unit = _per_nc_bytes(h, w, hp, ho, wo, itemsize)
        b = _pick_block(nc, per_unit, plan["budget"], plan["force_split"])
        kernel = functools.partial(_maxpool_kernel, channels_last=False, **common)
        out = pl.pallas_call(
            kernel,
            out_shape=jax.ShapeDtypeStruct((nc, ho, wo), x.dtype),
            grid_spec=pltpu.PrefetchScalarGridSpec(
                num_scalar_prefetch=0,
                grid=(pl.cdiv(nc, b),),
                in_specs=[pl.BlockSpec((b, h, w), lambda i: (i, 0, 0))],
                out_specs=pl.BlockSpec((b, ho, wo), lambda i: (i, 0, 0)),
                scratch_shapes=[pltpu.VMEM((b, hp, wo), x.dtype)],
            ),
            compiler_params=pltpu.CompilerParams(
                dimension_semantics=("parallel",),
                vmem_limit_bytes=plan["limit"],
            ),
        )(x_r)
        return out.reshape(n, c, ho, wo)

    # ---- Channels-last fallback for small W: N*C rides the 128 lanes. -----
    x_cl = jnp.transpose(x, (2, 3, 0, 1)).reshape(h, w, nc)
    per_unit = _per_lane_bytes(h, w, hp, ho, wo, itemsize)
    b = _pick_block(nc, per_unit, plan["budget"], plan["force_split"])
    kernel = functools.partial(_maxpool_kernel, channels_last=True, **common)
    out_cl = pl.pallas_call(
        kernel,
        out_shape=jax.ShapeDtypeStruct((ho, wo, nc), x.dtype),
        grid_spec=pltpu.PrefetchScalarGridSpec(
            num_scalar_prefetch=0,
            grid=(pl.cdiv(nc, b),),
            in_specs=[pl.BlockSpec((h, w, b), lambda i: (0, 0, i))],
            out_specs=pl.BlockSpec((ho, wo, b), lambda i: (0, 0, i)),
            scratch_shapes=[pltpu.VMEM((hp, wo, b), x.dtype)],
        ),
        compiler_params=pltpu.CompilerParams(
            dimension_semantics=("parallel",),
            vmem_limit_bytes=plan["limit"],
        ),
    )(x_cl)
    return jnp.transpose(out_cl.reshape(ho, wo, n, c), (2, 3, 0, 1))


def padded_max_pool2d_nhwc(x, kernel_size, stride=None, padding=(0, 0, 0, 0),
                           dilation=1):
    """Channels-last (N, H, W, C) variant: zero layout passes.  Prefer this
    entry point when the surrounding model keeps activations NHWC."""
    ksize = _pair(kernel_size)
    strd = _pair(stride if stride else kernel_size)
    dil = _pair(dilation)
    left, right, top, bottom = (int(p) for p in padding)
    pad = (left, right, top, bottom)

    n, h, w, c = x.shape
    hp, _, ho, wo = _out_hw(h, w, ksize, strd, dil, pad)
    itemsize = jnp.dtype(x.dtype).itemsize
    plan = _vmem_plan()
    per_unit = _per_lane_bytes(h, w, hp, ho, wo, itemsize)
    cb = _pick_block(c, per_unit, plan["budget"], plan["force_split"])

    kernel = functools.partial(_maxpool_kernel, channels_last=True,
                               kernel_size=ksize, stride=strd, dilation=dil,
                               pad=pad, in_hw=(h, w), out_hw=(ho, wo))
    return pl.pallas_call(
        kernel,
        out_shape=jax.ShapeDtypeStruct((n, ho, wo, c), x.dtype),
        grid_spec=pltpu.PrefetchScalarGridSpec(
            num_scalar_prefetch=0,
            grid=(n, pl.cdiv(c, cb)),
            in_specs=[pl.BlockSpec((None, h, w, cb), lambda ni, ci: (ni, 0, 0, ci))],
            out_specs=pl.BlockSpec((None, ho, wo, cb), lambda ni, ci: (ni, 0, 0, ci)),
            scratch_shapes=[pltpu.VMEM((hp, wo, cb), x.dtype)],
        ),
        compiler_params=pltpu.CompilerParams(
            dimension_semantics=("parallel", "parallel"),
            vmem_limit_bytes=plan["limit"],
        ),
    )(x)


class PaddedMaxPool2d:
    """Drop-in (JAX) equivalent of the PyTorch module (NCHW in / NCHW out)."""

    def __init__(self, kernel_size, stride=None, padding=(0, 0, 0, 0), dilation=1):
        self.kernel_size = kernel_size
        self.stride = stride or kernel_size
        self.padding = padding
        self.dilation = dilation

    def __call__(self, x):
        return padded_max_pool2d(x, self.kernel_size, self.stride,
                                 self.padding, self.dilation)


# --------------------------------------------------------------------------
# Reference + self-test
# --------------------------------------------------------------------------
def _reference(x, kernel_size, stride, padding, dilation):
    """Pure-JAX reference (reduce_window over a replicate-padded input)."""
    ksize = _pair(kernel_size)
    strd = _pair(stride if stride else kernel_size)
    dil = _pair(dilation)
    left, right, top, bottom = padding
    xp = jnp.pad(x, ((0, 0), (0, 0), (top, bottom), (left, right)), mode="edge")
    return lax.reduce_window(
        xp, -jnp.inf, lax.max,
        window_dimensions=(1, 1, ksize[0], ksize[1]),
        window_strides=(1, 1, strd[0], strd[1]),
        padding="VALID",
        window_dilation=(1, 1, dil[0], dil[1]),
    )


if __name__ == "__main__":
    key = jax.random.PRNGKey(0)

    # NCHW input, small W -> lane-dense channels-last path.
    x = jax.random.normal(key, (2, 4, 16, 16), dtype=jnp.float32)
    configs = [
        # (kernel_size, stride, padding(l, r, t, b), dilation)
        (2, 1, (0, 1, 0, 1), 1),      # size-preserving pool (typical use)
        (3, 1, (1, 1, 1, 1), 1),      # padding on all four sides
        (2, None, (0, 0, 0, 0), 1),   # default stride (= kernel size)
        (3, 2, (1, 1, 1, 1), 1),      # stride 2 with padding
        (2, 1, (1, 1, 1, 1), 2),      # dilation 2
    ]
    for ks, st, pad, dil in configs:
        mod = PaddedMaxPool2d(ks, st, pad, dil)
        out = jax.block_until_ready(mod(x))
        ref = _reference(x, ks, st, pad, dil)
        assert out.shape == ref.shape, (out.shape, ref.shape)
        assert jnp.allclose(out, ref), f"NCHW mismatch for {(ks, st, pad, dil)}"

    # Lane-friendly W (>= 128): exercises the transpose-free NCHW-direct path.
    x_wide = jax.random.normal(jax.random.PRNGKey(1), (1, 2, 8, 128),
                               dtype=jnp.float32)
    for ks, st, pad, dil in [(2, 1, (0, 1, 0, 1), 1), (3, 1, (1, 1, 1, 1), 1)]:
        out = jax.block_until_ready(padded_max_pool2d(x_wide, ks, st, pad, dil))
        ref = _reference(x_wide, ks, st, pad, dil)
        assert out.shape == ref.shape, (out.shape, ref.shape)
        assert jnp.allclose(out, ref), f"wide-W mismatch for {(ks, st, pad, dil)}"

    # NHWC entry point: zero layout passes for channels-last models.
    x_nhwc = jnp.transpose(x, (0, 2, 3, 1))
    out_nhwc = jax.block_until_ready(
        padded_max_pool2d_nhwc(x_nhwc, 2, 1, (0, 1, 0, 1), 1))
    ref_nhwc = jnp.transpose(_reference(x, 2, 1, (0, 1, 0, 1), 1), (0, 2, 3, 1))
    assert out_nhwc.shape == ref_nhwc.shape
    assert jnp.allclose(out_nhwc, ref_nhwc), "NHWC mismatch"

    print("KERNEL_OK")
</pallas_src>

<mosaic_0001>
module attributes {stable_mosaic.version = 11 : i64} {
  func.func @_maxpool_kernel(%arg0: i32, %arg1: memref<16x16x8xf32, #tpu.memory_space<vmem>>, %arg2: memref<16x16x8xf32, #tpu.memory_space<vmem>>, %arg3: memref<17x16x8xf32, #tpu.memory_space<vmem>>) attributes {dimension_semantics = [#tpu.dimension_semantics<parallel>], iteration_bounds = array<i64: 1>, scalar_prefetch = 0 : i64, scratch_operands = 1 : i64, tpu.core_type = #tpu.core_type<tc>, window_params = [{transform_indices = @transform_0, window_bounds = array<i64: 16, 16, 8>}, {transform_indices = @transform_1, window_bounds = array<i64: 16, 16, 8>}]} {
    %c0 = arith.constant 0 : index
    %c0_0 = arith.constant 0 : index
    %c0_1 = arith.constant 0 : index
    %0 = vector.load %arg1[%c0, %c0_0, %c0_1] : memref<16x16x8xf32, #tpu.memory_space<vmem>>, vector<16x15x8xf32>
    %c0_2 = arith.constant 0 : index
    %c1 = arith.constant 1 : index
    %c0_3 = arith.constant 0 : index
    %1 = vector.load %arg1[%c0_2, %c1, %c0_3] : memref<16x16x8xf32, #tpu.memory_space<vmem>>, vector<16x15x8xf32>
    %2 = arith.maximumf %0, %1 : vector<16x15x8xf32>
    %c0_4 = arith.constant 0 : index
    %c0_5 = arith.constant 0 : index
    %c0_6 = arith.constant 0 : index
    %3 = vector.load %arg3[%c0_4, %c0_5, %c0_6] : memref<17x16x8xf32, #tpu.memory_space<vmem>>, vector<16x15x8xf32>
    tpu.vector_store %arg3[%c0_4, %c0_5, %c0_6], %2 {strides = array<i32>} : memref<17x16x8xf32, #tpu.memory_space<vmem>>, vector<16x15x8xf32>,
    %c0_7 = arith.constant 0 : index
    %c15 = arith.constant 15 : index
    %c0_8 = arith.constant 0 : index
    %4 = vector.load %arg1[%c0_7, %c15, %c0_8] : memref<16x16x8xf32, #tpu.memory_space<vmem>>, vector<16x1x8xf32>
    %c0_9 = arith.constant 0 : index
    %c15_10 = arith.constant 15 : index
    %c0_11 = arith.constant 0 : index
    %5 = vector.load %arg1[%c0_9, %c15_10, %c0_11] : memref<16x16x8xf32, #tpu.memory_space<vmem>>, vector<16x1x8xf32>
    %6 = arith.maximumf %4, %5 : vector<16x1x8xf32>
    %c0_12 = arith.constant 0 : index
    %c15_13 = arith.constant 15 : index
    %c0_14 = arith.constant 0 : index
    %7 = vector.load %arg3[%c0_12, %c15_13, %c0_14] : memref<17x16x8xf32, #tpu.memory_space<vmem>>, vector<16x1x8xf32>
    tpu.vector_store %arg3[%c0_12, %c15_13, %c0_14], %6 {strides = array<i32>} : memref<17x16x8xf32, #tpu.memory_space<vmem>>, vector<16x1x8xf32>,
    %c15_15 = arith.constant 15 : index
    %c0_16 = arith.constant 0 : index
    %c0_17 = arith.constant 0 : index
    %8 = vector.load %arg3[%c15_15, %c0_16, %c0_17] : memref<17x16x8xf32, #tpu.memory_space<vmem>>, vector<1x16x8xf32>
    %c16 = arith.constant 16 : index
    %c0_18 = arith.constant 0 : index
    %c0_19 = arith.constant 0 : index
    %9 = vector.load %arg3[%c16, %c0_18, %c0_19] : memref<17x16x8xf32, #tpu.memory_space<vmem>>, vector<1x16x8xf32>
    tpu.vector_store %arg3[%c16, %c0_18, %c0_19], %8 {strides = array<i32>} : memref<17x16x8xf32, #tpu.memory_space<vmem>>, vector<1x16x8xf32>,
    %c0_20 = arith.constant 0 : index
    %c0_21 = arith.constant 0 : index
    %c0_22 = arith.constant 0 : index
    %10 = vector.load %arg3[%c0_20, %c0_21, %c0_22] : memref<17x16x8xf32, #tpu.memory_space<vmem>>, vector<16x16x8xf32>
    %c1_23 = arith.constant 1 : index
    %c0_24 = arith.constant 0 : index
    %c0_25 = arith.constant 0 : index
    %11 = vector.load %arg3[%c1_23, %c0_24, %c0_25] : memref<17x16x8xf32, #tpu.memory_space<vmem>>, vector<16x16x8xf32>
    %12 = arith.maximumf %10, %11 : vector<16x16x8xf32>
    %c0_26 = arith.constant 0 : index
    %c0_27 = arith.constant 0 : index
    %c0_28 = arith.constant 0 : index
    %13 = vector.load %arg2[%c0_26, %c0_27, %c0_28] : memref<16x16x8xf32, #tpu.memory_space<vmem>>, vector<16x16x8xf32>
    tpu.vector_store %arg2[%c0_26, %c0_27, %c0_28], %12 {strides = array<i32>} : memref<16x16x8xf32, #tpu.memory_space<vmem>>, vector<16x16x8xf32>,
    return
  }
  func.func @transform_0(%arg0: i32) -> (i32, i32, i32) {
    %c0_i32 = arith.constant 0 : i32
    %c0_i32_0 = arith.constant 0 : i32
    %c0_i32_1 = arith.constant 0 : i32
    return %c0_i32, %c0_i32_0, %arg0 : i32, i32, i32
  }
  func.func @transform_1(%arg0: i32) -> (i32, i32, i32) {
    %c0_i32 = arith.constant 0 : i32
    %c0_i32_0 = arith.constant 0 : i32
    %c0_i32_1 = arith.constant 0 : i32
    return %c0_i32, %c0_i32_0, %arg0 : i32, i32, i32
  }
}

</mosaic_0001>

<llo_original>
// kernel: tpu_custom_call.1
$region0: #{tpu_custom_call.1}
  #allocation0 [shape = 'u32[]', space=smem, size = 0x4, offset = 0x4, fixed_abs, tag = 'smem constant byte address 0x4 - core index']
  #allocation1 [shape = 'u32[144,128]{1,0:T(1,128)}', space=vmem, size = 0x12000, scoped, tag = 'internal scratch']
  #allocation2 [shape = 'f32[17,16,8]{2,1,0:T(8,128)}', space=vmem, size = 0x22000, scoped, tag = 'scratch operand']
  %s0 = inlined_call_operand.vmem [shape: f32[16,16,8], index: 0, kind: input, shape index: {}]
  %s1 = inlined_call_operand.vmem [shape: f32[16,16,8], index: 1, kind: output, shape index: {}]
  %s2 = sld [smem:[#allocation0]]
  $region14: #{tpu_custom_call.1} parent=0
    _
  %s4 = ssub.s32 1, %s2
  %s5 = scalar_select 0, %s4, %s2
  // Predicated region
  $region2: #{tpu_custom_call.1} parent=0 // pred_check
    _
  $region3: #{tpu_custom_call.1} parent=0 // pred_check_branch
    %7 = sbr.rel (0) target = $region5
  $region4: #{tpu_custom_call.1} parent=0 // pred_region
    _
  $region5: #{tpu_custom_call.1} parent=0 // pred_fallthru
    _
  %v8 = vld [vmem:[%s0] sm:$0xff]
  %v9 = vld [vmem:[%s0 + $0x8] sm:$0x7f]
  %v10 = vld [vmem:[%s0 + $0x10] sm:$0xff]
  %v11 = vld [vmem:[%s0 + $0x18] sm:$0x7f]
  %v12 = vld [vmem:[%s0 + $0x20] sm:$0xff]
  %v13 = vld [vmem:[%s0 + $0x28] sm:$0x7f]
  %v14 = vld [vmem:[%s0 + $0x30] sm:$0xff]
  %v15 = vld [vmem:[%s0 + $0x38] sm:$0x7f]
  %v16 = vld [vmem:[%s0 + $0x40] sm:$0xff]
  %v17 = vld [vmem:[%s0 + $0x48] sm:$0x7f]
  %v18 = vld [vmem:[%s0 + $0x50] sm:$0xff]
  %v19 = vld [vmem:[%s0 + $0x58] sm:$0x7f]
  %v20 = vld [vmem:[%s0 + $0x60] sm:$0xff]
  %v21 = vld [vmem:[%s0 + $0x68] sm:$0x7f]
  %v22 = vld [vmem:[%s0 + $0x70] sm:$0xff]
  %v23 = vld [vmem:[%s0 + $0x78] sm:$0x7f]
  %v24 = vld [vmem:[%s0 + $0x80] sm:$0xff]
  %v25 = vld [vmem:[%s0 + $0x88] sm:$0x7f]
  %v26 = vld [vmem:[%s0 + $0x90] sm:$0xff]
  %v27 = vld [vmem:[%s0 + $0x98] sm:$0x7f]
  %v28 = vld [vmem:[%s0 + $0xa0] sm:$0xff]
  %v29 = vld [vmem:[%s0 + $0xa8] sm:$0x7f]
  %v30 = vld [vmem:[%s0 + $0xb0] sm:$0xff]
  %v31 = vld [vmem:[%s0 + $0xb8] sm:$0x7f]
  %v32 = vld [vmem:[%s0 + $0xc0] sm:$0xff]
  %v33 = vld [vmem:[%s0 + $0xc8] sm:$0x7f]
  %v34 = vld [vmem:[%s0 + $0xd0] sm:$0xff]
  %v35 = vld [vmem:[%s0 + $0xd8] sm:$0x7f]
  %v36 = vld [vmem:[%s0 + $0xe0] sm:$0xff]
  %v37 = vld [vmem:[%s0 + $0xe8] sm:$0x7f]
  %v38 = vld [vmem:[%s0 + $0xf0] sm:$0xff]
  %v39 = vld [vmem:[%s0 + $0xf8] sm:$0x7f]
  %v40 = vld [vmem:[%s0 + $0x1] sm:$0xff]
  %v41 = vld [vmem:[%s0 + $0x9] sm:$0x7f]
  %v42 = vld [vmem:[%s0 + $0x11] sm:$0xff]
  %v43 = vld [vmem:[%s0 + $0x19] sm:$0x7f]
  %v44 = vld [vmem:[%s0 + $0x21] sm:$0xff]
  %v45 = vld [vmem:[%s0 + $0x29] sm:$0x7f]
  %v46 = vld [vmem:[%s0 + $0x31] sm:$0xff]
  %v47 = vld [vmem:[%s0 + $0x39] sm:$0x7f]
  %v48 = vld [vmem:[%s0 + $0x41] sm:$0xff]
  %v49 = vld [vmem:[%s0 + $0x49] sm:$0x7f]
  %v50 = vld [vmem:[%s0 + $0x51] sm:$0xff]
  %v51 = vld [vmem:[%s0 + $0x59] sm:$0x7f]
  %v52 = vld [vmem:[%s0 + $0x61] sm:$0xff]
  %v53 = vld [vmem:[%s0 + $0x69] sm:$0x7f]
  %v54 = vld [vmem:[%s0 + $0x71] sm:$0xff]
  %v55 = vld [vmem:[%s0 + $0x79] sm:$0x7f]
  %v56 = vld [vmem:[%s0 + $0x81] sm:$0xff]
  %v57 = vld [vmem:[%s0 + $0x89] sm:$0x7f]
  %v58 = vld [vmem:[%s0 + $0x91] sm:$0xff]
  %v59 = vld [vmem:[%s0 + $0x99] sm:$0x7f]
  %v60 = vld [vmem:[%s0 + $0xa1] sm:$0xff]
  %v61 = vld [vmem:[%s0 + $0xa9] sm:$0x7f]
  %v62 = vld [vmem:[%s0 + $0xb1] sm:$0xff]
  %v63 = vld [vmem:[%s0 + $0xb9] sm:$0x7f]
  %v64 = vld [vmem:[%s0 + $0xc1] sm:$0xff]
  %v65 = vld [vmem:[%s0 + $0xc9] sm:$0x7f]
  %v66 = vld [vmem:[%s0 + $0xd1] sm:$0xff]
  %v67 = vld [vmem:[%s0 + $0xd9] sm:$0x7f]
  %v68 = vld [vmem:[%s0 + $0xe1] sm:$0xff]
  %v69 = vld [vmem:[%s0 + $0xe9] sm:$0x7f]
  %v70 = vld [vmem:[%s0 + $0xf1] sm:$0xff]
  %v71 = vld [vmem:[%s0 + $0xf9] sm:$0x7f]
  %v72 = vmax.f32 %v8, %v40
  %v73 = vmax.f32 %v9, %v41
  %v74 = vmax.f32 %v10, %v42
  %v75 = vmax.f32 %v11, %v43
  %v76 = vmax.f32 %v12, %v44
  %v77 = vmax.f32 %v13, %v45
  %v78 = vmax.f32 %v14, %v46
  %v79 = vmax.f32 %v15, %v47
  %v80 = vmax.f32 %v16, %v48
  %v81 = vmax.f32 %v17, %v49
  %v82 = vmax.f32 %v18, %v50
  %v83 = vmax.f32 %v19, %v51
  %v84 = vmax.f32 %v20, %v52
  %v85 = vmax.f32 %v21, %v53
  %v86 = vmax.f32 %v22, %v54
  %v87 = vmax.f32 %v23, %v55
  %v88 = vmax.f32 %v24, %v56
  %v89 = vmax.f32 %v25, %v57
  %v90 = vmax.f32 %v26, %v58
  %v91 = vmax.f32 %v27, %v59
  %v92 = vmax.f32 %v28, %v60
  %v93 = vmax.f32 %v29, %v61
  %v94 = vmax.f32 %v30, %v62
  %v95 = vmax.f32 %v31, %v63
  %v96 = vmax.f32 %v32, %v64
  %v97 = vmax.f32 %v33, %v65
  %v98 = vmax.f32 %v34, %v66
  %v99 = vmax.f32 %v35, %v67
  %v100 = vmax.f32 %v36, %v68
  %v101 = vmax.f32 %v37, %v69
  %v102 = vmax.f32 %v38, %v70
  %v103 = vmax.f32 %v39, %v71
  %vm104 = vcmask 64512
  %105 = vst.msk [vmem:[#allocation2] sm:$0xff] %vm104, %v72
  %vm106 = vcmask 63488
  %107 = vst.msk [vmem:[#allocation2 + $0x8] sm:$0x7f] %vm106, %v73
  %108 = vst.msk [vmem:[#allocation2 + $0x10] sm:$0xff] %vm104, %v74
  %109 = vst.msk [vmem:[#allocation2 + $0x18] sm:$0x7f] %vm106, %v75
  %110 = vst.msk [vmem:[#allocation2 + $0x20] sm:$0xff] %vm104, %v76
  %111 = vst.msk [vmem:[#allocation2 + $0x28] sm:$0x7f] %vm106, %v77
  %112 = vst.msk [vmem:[#allocation2 + $0x30] sm:$0xff] %vm104, %v78
  %113 = vst.msk [vmem:[#allocation2 + $0x38] sm:$0x7f] %vm106, %v79
  %114 = vst.msk [vmem:[#allocation2 + $0x40] sm:$0xff] %vm104, %v80
  %115 = vst.msk [vmem:[#allocation2 + $0x48] sm:$0x7f] %vm106, %v81
  %116 = vst.msk [vmem:[#allocation2 + $0x50] sm:$0xff] %vm104, %v82
  %117 = vst.msk [vmem:[#allocation2 + $0x58] sm:$0x7f] %vm106, %v83
  %118 = vst.msk [vmem:[#allocation2 + $0x60] sm:$0xff] %vm104, %v84
  %119 = vst.msk [vmem:[#allocation2 + $0x68] sm:$0x7f] %vm106, %v85
  %120 = vst.msk [vmem:[#allocation2 + $0x70] sm:$0xff] %vm104, %v86
  %121 = vst.msk [vmem:[#allocation2 + $0x78] sm:$0x7f] %vm106, %v87
  %122 = vst.msk [vmem:[#allocation2 + $0x80] sm:$0xff] %vm104, %v88
  %123 = vst.msk [vmem:[#allocation2 + $0x88] sm:$0x7f] %vm106, %v89
  %124 = vst.msk [vmem:[#allocation2 + $0x90] sm:$0xff] %vm104, %v90
  %125 = vst.msk [vmem:[#allocation2 + $0x98] sm:$0x7f] %vm106, %v91
  %126 = vst.msk [vmem:[#allocation2 + $0xa0] sm:$0xff] %vm104, %v92
  %127 = vst.msk [vmem:[#allocation2 + $0xa8] sm:$0x7f] %vm106, %v93
  %128 = vst.msk [vmem:[#allocation2 + $0xb0] sm:$0xff] %vm104, %v94
  %129 = vst.msk [vmem:[#allocation2 + $0xb8] sm:$0x7f] %vm106, %v95
  %130 = vst.msk [vmem:[#allocation2 + $0xc0] sm:$0xff] %vm104, %v96
  %131 = vst.msk [vmem:[#allocation2 + $0xc8] sm:$0x7f] %vm106, %v97
  %132 = vst.msk [vmem:[#allocation2 + $0xd0] sm:$0xff] %vm104, %v98
  %133 = vst.msk [vmem:[#allocation2 + $0xd8] sm:$0x7f] %vm106, %v99
  %134 = vst.msk [vmem:[#allocation2 + $0xe0] sm:$0xff] %vm104, %v100
  %135 = vst.msk [vmem:[#allocation2 + $0xe8] sm:$0x7f] %vm106, %v101
  %136 = vst.msk [vmem:[#allocation2 + $0xf0] sm:$0xff] %vm104, %v102
  %137 = vst.msk [vmem:[#allocation2 + $0xf8] sm:$0x7f] %vm106, %v103
  %v138 = vld [vmem:[%s0 + $0xf] sm:$0x1]
  %v139 = vld [vmem:[%s0 + $0x1f] sm:$0x1]
  %v140 = vld [vmem:[%s0 + $0x2f] sm:$0x1]
  %v141 = vld [vmem:[%s0 + $0x3f] sm:$0x1]
  %v142 = vld [vmem:[%s0 + $0x4f] sm:$0x1]
  %v143 = vld [vmem:[%s0 + $0x5f] sm:$0x1]
  %v144 = vld [vmem:[%s0 + $0x6f] sm:$0x1]
  %v145 = vld [vmem:[%s0 + $0x7f] sm:$0x1]
  %v146 = vld [vmem:[%s0 + $0x8f] sm:$0x1]
  %v147 = vld [vmem:[%s0 + $0x9f] sm:$0x1]
  %v148 = vld [vmem:[%s0 + $0xaf] sm:$0x1]
  %v149 = vld [vmem:[%s0 + $0xbf] sm:$0x1]
  %v150 = vld [vmem:[%s0 + $0xcf] sm:$0x1]
  %v151 = vld [vmem:[%s0 + $0xdf] sm:$0x1]
  %v152 = vld [vmem:[%s0 + $0xef] sm:$0x1]
  %v153 = vld [vmem:[%s0 + $0xff] sm:$0x1]
  %vm154 = vcmask 57344
  %155 = vst.msk [vmem:[#allocation2 + $0xf] sm:$0x1] %vm154, %v138
  %156 = vst.msk [vmem:[#allocation2 + $0x1f] sm:$0x1] %vm154, %v139
  %157 = vst.msk [vmem:[#allocation2 + $0x2f] sm:$0x1] %vm154, %v140
  %158 = vst.msk [vmem:[#allocation2 + $0x3f] sm:$0x1] %vm154, %v141
  %159 = vst.msk [vmem:[#allocation2 + $0x4f] sm:$0x1] %vm154, %v142
  %160 = vst.msk [vmem:[#allocation2 + $0x5f] sm:$0x1] %vm154, %v143
  %161 = vst.msk [vmem:[#allocation2 + $0x6f] sm:$0x1] %vm154, %v144
  %162 = vst.msk [vmem:[#allocation2 + $0x7f] sm:$0x1] %vm154, %v145
  %163 = vst.msk [vmem:[#allocation2 + $0x8f] sm:$0x1] %vm154, %v146
  %164 = vst.msk [vmem:[#allocation2 + $0x9f] sm:$0x1] %vm154, %v147
  %165 = vst.msk [vmem:[#allocation2 + $0xaf] sm:$0x1] %vm154, %v148
  %166 = vst.msk [vmem:[#allocation2 + $0xbf] sm:$0x1] %vm154, %v149
  %167 = vst.msk [vmem:[#allocation2 + $0xcf] sm:$0x1] %vm154, %v150
  %168 = vst.msk [vmem:[#allocation2 + $0xdf] sm:$0x1] %vm154, %v151
  %169 = vst.msk [vmem:[#allocation2 + $0xef] sm:$0x1] %vm154, %v152
  %170 = vst.msk [vmem:[#allocation2 + $0xff] sm:$0x1] %vm154, %v153
  %s171 = scalar_lea.vmem [#allocation2], 240
  %v172 = vld [vmem:[%s171] sm:$0xff]
  %v173 = vld [vmem:[%s171 + $0x8] sm:$0xff]
  %s174 = scalar_lea.vmem [#allocation2], 256
  %175 = vst.msk [vmem:[%s174] sm:$0xff] %vm104, %v172
  %176 = vst.msk [vmem:[%s174 + $0x8] sm:$0xff] %vm104, %v173
  %v177 = vld [vmem:[#allocation2] sm:$0xff]
  %v178 = vld [vmem:[#allocation2 + $0x8] sm:$0xff]
  %v179 = vld [vmem:[#allocation2 + $0x10] sm:$0xff]
  %v180 = vld [vmem:[#allocation2 + $0x18] sm:$0xff]
  %v181 = vld [vmem:[#allocation2 + $0x20] sm:$0xff]
  %v182 = vld [vmem:[#allocation2 + $0x28] sm:$0xff]
  %v183 = vld [vmem:[#allocation2 + $0x30] sm:$0xff]
  %v184 = vld [vmem:[#allocation2 + $0x38] sm:$0xff]
  %v185 = vld [vmem:[#allocation2 + $0x40] sm:$0xff]
  %v186 = vld [vmem:[#allocation2 + $0x48] sm:$0xff]
  %v187 = vld [vmem:[#allocation2 + $0x50] sm:$0xff]
  %v188 = vld [vmem:[#allocation2 + $0x58] sm:$0xff]
  %v189 = vld [vmem:[#allocation2 + $0x60] sm:$0xff]
  %v190 = vld [vmem:[#allocation2 + $0x68] sm:$0xff]
  %v191 = vld [vmem:[#allocation2 + $0x70] sm:$0xff]
  %v192 = vld [vmem:[#allocation2 + $0x78] sm:$0xff]
  %v193 = vld [vmem:[#allocation2 + $0x80] sm:$0xff]
  %v194 = vld [vmem:[#allocation2 + $0x88] sm:$0xff]
  %v195 = vld [vmem:[#allocation2 + $0x90] sm:$0xff]
  %v196 = vld [vmem:[#allocation2 + $0x98] sm:$0xff]
  %v197 = vld [vmem:[#allocation2 + $0xa0] sm:$0xff]
  %v198 = vld [vmem:[#allocation2 + $0xa8] sm:$0xff]
  %v199 = vld [vmem:[#allocation2 + $0xb0] sm:$0xff]
  %v200 = vld [vmem:[#allocation2 + $0xb8] sm:$0xff]
  %v201 = vld [vmem:[#allocation2 + $0xc0] sm:$0xff]
  %v202 = vld [vmem:[#allocation2 + $0xc8] sm:$0xff]
  %v203 = vld [vmem:[#allocation2 + $0xd0] sm:$0xff]
  %v204 = vld [vmem:[#allocation2 + $0xd8] sm:$0xff]
  %v205 = vld [vmem:[#allocation2 + $0xe0] sm:$0xff]
  %v206 = vld [vmem:[#allocation2 + $0xe8] sm:$0xff]
  %v207 = vld [vmem:[#allocation2 + $0xf0] sm:$0xff]
  %v208 = vld [vmem:[#allocation2 + $0xf8] sm:$0xff]
  %s209 = scalar_lea.vmem [#allocation2], 16
  %v210 = vld [vmem:[%s209] sm:$0xff]
  %v211 = vld [vmem:[%s209 + $0x8] sm:$0xff]
  %v212 = vld [vmem:[%s209 + $0x10] sm:$0xff]
  %v213 = vld [vmem:[%s209 + $0x18] sm:$0xff]
  %v214 = vld [vmem:[%s209 + $0x20] sm:$0xff]
  %v215 = vld [vmem:[%s209 + $0x28] sm:$0xff]
  %v216 = vld [vmem:[%s209 + $0x30] sm:$0xff]
  %v217 = vld [vmem:[%s209 + $0x38] sm:$0xff]
  %v218 = vld [vmem:[%s209 + $0x40] sm:$0xff]
  %v219 = vld [vmem:[%s209 + $0x48] sm:$0xff]
  %v220 = vld [vmem:[%s209 + $0x50] sm:$0xff]
  %v221 = vld [vmem:[%s209 + $0x58] sm:$0xff]
  %v222 = vld [vmem:[%s209 + $0x60] sm:$0xff]
  %v223 = vld [vmem:[%s209 + $0x68] sm:$0xff]
  %v224 = vld [vmem:[%s209 + $0x70] sm:$0xff]
  %v225 = vld [vmem:[%s209 + $0x78] sm:$0xff]
  %v226 = vld [vmem:[%s209 + $0x80] sm:$0xff]
  %v227 = vld [vmem:[%s209 + $0x88] sm:$0xff]
  %v228 = vld [vmem:[%s209 + $0x90] sm:$0xff]
  %v229 = vld [vmem:[%s209 + $0x98] sm:$0xff]
  %v230 = vld [vmem:[%s209 + $0xa0] sm:$0xff]
  %v231 = vld [vmem:[%s209 + $0xa8] sm:$0xff]
  %v232 = vld [vmem:[%s209 + $0xb0] sm:$0xff]
  %v233 = vld [vmem:[%s209 + $0xb8] sm:$0xff]
  %v234 = vld [vmem:[%s209 + $0xc0] sm:$0xff]
  %v235 = vld [vmem:[%s209 + $0xc8] sm:$0xff]
  %v236 = vld [vmem:[%s209 + $0xd0] sm:$0xff]
  %v237 = vld [vmem:[%s209 + $0xd8] sm:$0xff]
  %v238 = vld [vmem:[%s209 + $0xe0] sm:$0xff]
  %v239 = vld [vmem:[%s209 + $0xe8] sm:$0xff]
  %v240 = vld [vmem:[%s209 + $0xf0] sm:$0xff]
  %v241 = vld [vmem:[%s209 + $0xf8] sm:$0xff]
  %v242 = vmax.f32 %v177, %v210
  %v243 = vmax.f32 %v178, %v211
  %v244 = vmax.f32 %v179, %v212
  %v245 = vmax.f32 %v180, %v213
  %v246 = vmax.f32 %v181, %v214
  %v247 = vmax.f32 %v182, %v215
  %v248 = vmax.f32 %v183, %v216
  %v249 = vmax.f32 %v184, %v217
  %v250 = vmax.f32 %v185, %v218
  %v251 = vmax.f32 %v186, %v219
  %v252 = vmax.f32 %v187, %v220
  %v253 = vmax.f32 %v188, %v221
  %v254 = vmax.f32 %v189, %v222
  %v255 = vmax.f32 %v190, %v223
  %v256 = vmax.f32 %v191, %v224
  %v257 = vmax.f32 %v192, %v225
  %v258 = vmax.f32 %v193, %v226
  %v259 = vmax.f32 %v194, %v227
  %v260 = vmax.f32 %v195, %v228
  %v261 = vmax.f32 %v196, %v229
  %v262 = vmax.f32 %v197, %v230
  %v263 = vmax.f32 %v198, %v231
  %v264 = vmax.f32 %v199, %v232
  %v265 = vmax.f32 %v200, %v233
  %v266 = vmax.f32 %v201, %v234
  %v267 = vmax.f32 %v202, %v235
  %v268 = vmax.f32 %v203, %v236
  %v269 = vmax.f32 %v204, %v237
  %v270 = vmax.f32 %v205, %v238
  %v271 = vmax.f32 %v206, %v239
  %v272 = vmax.f32 %v207, %v240
  %v273 = vmax.f32 %v208, %v241
  %274 = vst.msk [vmem:[%s1] sm:$0xff] %vm104, %v242
  %275 = vst.msk [vmem:[%s1 + $0x8] sm:$0xff] %vm104, %v243
  %276 = vst.msk [vmem:[%s1 + $0x10] sm:$0xff] %vm104, %v244
  %277 = vst.msk [vmem:[%s1 + $0x18] sm:$0xff] %vm104, %v245
  %278 = vst.msk [vmem:[%s1 + $0x20] sm:$0xff] %vm104, %v246
  %279 = vst.msk [vmem:[%s1 + $0x28] sm:$0xff] %vm104, %v247
  %280 = vst.msk [vmem:[%s1 + $0x30] sm:$0xff] %vm104, %v248
  %281 = vst.msk [vmem:[%s1 + $0x38] sm:$0xff] %vm104, %v249
  %282 = vst.msk [vmem:[%s1 + $0x40] sm:$0xff] %vm104, %v250
  %283 = vst.msk [vmem:[%s1 + $0x48] sm:$0xff] %vm104, %v251
  %284 = vst.msk [vmem:[%s1 + $0x50] sm:$0xff] %vm104, %v252
  %285 = vst.msk [vmem:[%s1 + $0x58] sm:$0xff] %vm104, %v253
  %286 = vst.msk [vmem:[%s1 + $0x60] sm:$0xff] %vm104, %v254
  %287 = vst.msk [vmem:[%s1 + $0x68] sm:$0xff] %vm104, %v255
  %288 = vst.msk [vmem:[%s1 + $0x70] sm:$0xff] %vm104, %v256
  %289 = vst.msk [vmem:[%s1 + $0x78] sm:$0xff] %vm104, %v257
  %290 = vst.msk [vmem:[%s1 + $0x80] sm:$0xff] %vm104, %v258
  %291 = vst.msk [vmem:[%s1 + $0x88] sm:$0xff] %vm104, %v259
  %292 = vst.msk [vmem:[%s1 + $0x90] sm:$0xff] %vm104, %v260
  %293 = vst.msk [vmem:[%s1 + $0x98] sm:$0xff] %vm104, %v261
  %294 = vst.msk [vmem:[%s1 + $0xa0] sm:$0xff] %vm104, %v262
  %295 = vst.msk [vmem:[%s1 + $0xa8] sm:$0xff] %vm104, %v263
  %296 = vst.msk [vmem:[%s1 + $0xb0] sm:$0xff] %vm104, %v264
  %297 = vst.msk [vmem:[%s1 + $0xb8] sm:$0xff] %vm104, %v265
  %298 = vst.msk [vmem:[%s1 + $0xc0] sm:$0xff] %vm104, %v266
  %299 = vst.msk [vmem:[%s1 + $0xc8] sm:$0xff] %vm104, %v267
  %300 = vst.msk [vmem:[%s1 + $0xd0] sm:$0xff] %vm104, %v268
  %301 = vst.msk [vmem:[%s1 + $0xd8] sm:$0xff] %vm104, %v269
  %302 = vst.msk [vmem:[%s1 + $0xe0] sm:$0xff] %vm104, %v270
  %303 = vst.msk [vmem:[%s1 + $0xe8] sm:$0xff] %vm104, %v271
  %304 = vst.msk [vmem:[%s1 + $0xf0] sm:$0xff] %vm104, %v272
  %305 = vst.msk [vmem:[%s1 + $0xf8] sm:$0xff] %vm104, %v273
  // Predicated region
  $region6: #{tpu_custom_call.1} parent=0 // pred_check
    _
  $region7: #{tpu_custom_call.1} parent=0 // pred_check_branch
    %307 = sbr.rel (0) target = $region9
  $region8: #{tpu_custom_call.1} parent=0 // pred_region
    _
  $region9: #{tpu_custom_call.1} parent=0 // pred_fallthru
    _
  // Predicated region
  $region10: #{tpu_custom_call.1} parent=0 // pred_check
    _
  $region11: #{tpu_custom_call.1} parent=0 // pred_check_branch
    %309 = sbr.rel (0) target = $region13
  $region12: #{tpu_custom_call.1} parent=0 // pred_region
    _
  $region13: #{tpu_custom_call.1} parent=0 // pred_fallthru
    _

</llo_original>
